<compile_context>
chip_gen: v6e
topology: v6e:2x2x1
jax: 0.10.0
libtpu: 0.0.40
codegen_flags: <defaults>
</compile_context>

<pallas_src>
import functools

import jax
import jax.numpy as jnp
from jax.experimental import pallas as pl
from jax.experimental.pallas import tpu as pltpu

_EPS = 1e-5


# ----------------------------- Pallas kernel -----------------------------

def _fr_kernel(xs_ref, wt_ref, g_ref, b_ref, o_ref, scale_ref, shift_ref,
               *, inv_count):
    """Fused 1x1-conv + BatchNorm, channel-major, two-pass over the grid.

    Grid = (pass, batch, pixel_tile).  Pass 0 accumulates per-channel
    sum / sum-of-squares; pass 1 applies the affine normalization and writes.
    """
    p = pl.program_id(0)                       # 0 = stats pass, 1 = write pass
    n = pl.program_id(1)
    t = pl.program_id(2)
    first = jnp.logical_and(n == 0, t == 0)
    last = jnp.logical_and(n == pl.num_programs(1) - 1,
                           t == pl.num_programs(2) - 1)

    # 1x1 conv on the MXU: (Cout, K) @ (K, tp) -> (Cout, tp), f32 accumulate.
    y = jnp.dot(wt_ref[...], xs_ref[...], preferred_element_type=jnp.float32)

    @pl.when(p == 0)
    def _stats_pass():
        @pl.when(first)
        def _init():
            scale_ref[...] = jnp.zeros_like(scale_ref)
            shift_ref[...] = jnp.zeros_like(shift_ref)

        # Per-channel partial sums (lane reduce -> XLU, free slot vs MXU).
        scale_ref[...] = scale_ref[...] + jnp.sum(y, axis=1, keepdims=True)
        shift_ref[...] = shift_ref[...] + jnp.sum(y * y, axis=1, keepdims=True)

        @pl.when(last)
        def _finalize():
            mean = scale_ref[...] * inv_count
            var = shift_ref[...] * inv_count - mean * mean   # biased variance
            sc = jax.lax.rsqrt(var + _EPS) * g_ref[...]      # hoisted scale
            scale_ref[...] = sc
            shift_ref[...] = b_ref[...] - mean * sc

    @pl.when(p == 1)
    def _write_pass():
        o_ref[...] = (y * scale_ref[...] + shift_ref[...]).astype(o_ref.dtype)


def _pick_tile(P, rows_in, rows_out, budget_bytes=8 * 1024 * 1024):
    """Largest lane-dense pixel tile fitting a double-buffered VMEM budget."""
    for tp in (2048, 1024, 512, 256, 128):
        if P % tp == 0 and 8 * (rows_in + rows_out) * tp <= budget_bytes:
            return tp
    return P                                    # small inputs: full extent


def _run_conv_bn(xs, wt, gamma, beta):
    """xs: (N, K, P) channel-major activations; wt: (Cout, K) weight.

    Returns (N, Cout, P) = BatchNorm(wt @ xs) with batch statistics.
    """
    N, K, P = xs.shape
    Cout = wt.shape[0]
    tp = _pick_tile(P, K, Cout)
    T = P // tp

    g = gamma.reshape(Cout, 1).astype(jnp.float32)
    b = beta.reshape(Cout, 1).astype(jnp.float32)
    wt = wt.astype(xs.dtype)

    kernel = functools.partial(_fr_kernel, inv_count=1.0 / float(N * P))

    return pl.pallas_call(
        kernel,
        out_shape=jax.ShapeDtypeStruct((N, Cout, P), xs.dtype),
        grid=(2, N, T),
        in_specs=[
            pl.BlockSpec((None, K, tp), lambda p, n, t: (n, 0, t)),   # activations
            pl.BlockSpec((Cout, K), lambda p, n, t: (0, 0)),          # weight
            pl.BlockSpec((Cout, 1), lambda p, n, t: (0, 0)),          # gamma
            pl.BlockSpec((Cout, 1), lambda p, n, t: (0, 0)),          # beta
        ],
        # During the stats pass (p == 0) the output block index stays (0, 0, 0)
        # so no intermediate garbage write-backs happen; pass 1 visits every
        # block exactly once and fully writes it.
        out_specs=pl.BlockSpec((None, Cout, tp),
                               lambda p, n, t: (n * p, 0, t * p)),
        scratch_shapes=[pltpu.VMEM((Cout, 1), jnp.float32),   # sum  -> scale
                        pltpu.VMEM((Cout, 1), jnp.float32)],  # sumsq -> shift
        compiler_params=pltpu.CompilerParams(
            dimension_semantics=("arbitrary", "arbitrary", "arbitrary")),
    )(xs, wt, g, b)


# ------------------------------- wrappers -------------------------------

def factorized_reduction_stride2(x, w1, w2, gamma, beta):
    """x: (N, Cin, H, W) NCHW; w1, w2: (Cin, Cout//2); gamma, beta: (Cout,)."""
    N, Cin, H, W = x.shape
    Co2 = w1.shape[1]
    Cout = 2 * Co2
    Ho, Wo = (H + 1) // 2, (W + 1) // 2
    P = Ho * Wo

    # path1: AvgPool2d(k=1, stride=2) == even-index strided pick.
    x1 = x[:, :, ::2, ::2]
    # path2: shift by (1, 1) then strided pick; zero row/col only if H/W odd
    # (padding the already-downsampled tensor, not the full input).
    x2 = x[:, :, 1::2, 1::2]
    ph, pw = Ho - x2.shape[2], Wo - x2.shape[3]
    if ph or pw:
        x2 = jnp.pad(x2, ((0, 0), (0, 0), (0, ph), (0, pw)))

    # Channel-major stack: (N, 2*Cin, P).  No NHWC transposes anywhere.
    xs = jnp.concatenate([x1.reshape(N, Cin, P), x2.reshape(N, Cin, P)], axis=1)

    # Block-diagonal weight fuses both 1x1 convs into one MXU matmul; its row
    # order [path1 | path2] matches the BatchNorm channel split of gamma/beta.
    wb = jnp.zeros((Cout, 2 * Cin), dtype=x.dtype)
    wb = wb.at[:Co2, :Cin].set(w1.T).at[Co2:, Cin:].set(w2.T)

    out = _run_conv_bn(xs, wb, gamma, beta)          # (N, Cout, P)
    return out.reshape(N, Cout, Ho, Wo)              # already NCHW


def factorized_reduction_stride1(x, w, gamma, beta):
    """x: (N, Cin, H, W) NCHW; w: (Cin, Cout); gamma, beta: (Cout,)."""
    N, Cin, H, W = x.shape
    Cout = w.shape[1]
    xs = x.reshape(N, Cin, H * W)                    # channel-major, free reshape
    out = _run_conv_bn(xs, w.T, gamma, beta)         # (N, Cout, H*W)
    return out.reshape(N, Cout, H, W)


# ------------------------- pure-JAX references -------------------------

def _ref_bn(y, gamma, beta):
    mean = y.mean(axis=(0, 2, 3), keepdims=True)
    var = ((y - mean) ** 2).mean(axis=(0, 2, 3), keepdims=True)
    return ((y - mean) / jnp.sqrt(var + _EPS)
            * gamma.reshape(1, -1, 1, 1) + beta.reshape(1, -1, 1, 1))


def ref_stride2(x, w1, w2, gamma, beta):
    x1 = x[:, :, ::2, ::2]
    xp = jnp.pad(x, ((0, 0), (0, 0), (0, 1), (0, 1)))
    x2 = xp[:, :, 1::2, 1::2]
    y1 = jnp.einsum('nchw,co->nohw', x1, w1)
    y2 = jnp.einsum('nchw,co->nohw', x2, w2)
    return _ref_bn(jnp.concatenate([y1, y2], axis=1), gamma, beta)


def ref_stride1(x, w, gamma, beta):
    return _ref_bn(jnp.einsum('nchw,co->nohw', x, w), gamma, beta)


# --------------------------------- main ---------------------------------

if __name__ == "__main__":
    key = jax.random.PRNGKey(0)
    kx, kw1, kw2, kw = jax.random.split(key, 4)

    N, Cin, H, W = 2, 4, 16, 16
    Cout = 8

    x = jax.random.normal(kx, (N, Cin, H, W), dtype=jnp.float32)

    # PyTorch conv weights are (Cout, Cin, 1, 1); stored here as (Cin, Cout).
    w1 = 0.5 * jax.random.normal(kw1, (Cin, Cout // 2), dtype=jnp.float32)
    w2 = 0.5 * jax.random.normal(kw2, (Cin, Cout // 2), dtype=jnp.float32)
    w_s1 = 0.5 * jax.random.normal(kw, (Cin, Cout), dtype=jnp.float32)
    gamma = jnp.ones((Cout,), dtype=jnp.float32)     # BatchNorm2d default init
    beta = jnp.zeros((Cout,), dtype=jnp.float32)

    # stride=2 (default) path
    out2 = factorized_reduction_stride2(x, w1, w2, gamma, beta)
    jax.block_until_ready(out2)
    assert out2.shape == (N, Cout, H // 2, W // 2), out2.shape
    assert jnp.allclose(out2, ref_stride2(x, w1, w2, gamma, beta),
                        rtol=1e-4, atol=1e-4)

    # stride=1 path
    out1 = factorized_reduction_stride1(x, w_s1, gamma, beta)
    jax.block_until_ready(out1)
    assert out1.shape == (N, Cout, H, W), out1.shape
    assert jnp.allclose(out1, ref_stride1(x, w_s1, gamma, beta),
                        rtol=1e-4, atol=1e-4)

    print("KERNEL_OK")
</pallas_src>

<mosaic_0001>
module attributes {stable_mosaic.version = 11 : i64} {
  func.func @_fr_kernel(%arg0: i32, %arg1: i32, %arg2: i32, %arg3: memref<1x8x64xf32, #tpu.memory_space<vmem>>, %arg4: memref<8x8xf32, #tpu.memory_space<vmem>>, %arg5: memref<8x1xf32, #tpu.memory_space<vmem>>, %arg6: memref<8x1xf32, #tpu.memory_space<vmem>>, %arg7: memref<1x8x64xf32, #tpu.memory_space<vmem>>, %arg8: memref<8x1xf32, #tpu.memory_space<vmem>>, %arg9: memref<8x1xf32, #tpu.memory_space<vmem>>) attributes {dimension_semantics = [#tpu.dimension_semantics<arbitrary>, #tpu.dimension_semantics<arbitrary>, #tpu.dimension_semantics<arbitrary>], iteration_bounds = array<i64: 2, 2, 1>, scalar_prefetch = 0 : i64, scratch_operands = 2 : i64, tpu.core_type = #tpu.core_type<tc>, window_params = [{transform_indices = @transform_0, window_bounds = array<i64: 1, 8, 64>}, {pipeline_mode = #tpu.pipeline_mode<synchronous>, transform_indices = @transform_1, window_bounds = array<i64: 8, 8>}, {pipeline_mode = #tpu.pipeline_mode<synchronous>, transform_indices = @transform_2, window_bounds = array<i64: 8, 1>}, {pipeline_mode = #tpu.pipeline_mode<synchronous>, transform_indices = @transform_3, window_bounds = array<i64: 8, 1>}, {transform_indices = @transform_4, window_bounds = array<i64: 1, 8, 64>}]} {
    %c0_i32 = arith.constant 0 : i32
    %0 = arith.cmpi eq, %arg1, %c0_i32 : i32
    %c0_i32_0 = arith.constant 0 : i32
    %1 = arith.cmpi eq, %arg2, %c0_i32_0 : i32
    %2 = arith.andi %0, %1 : i1
    %c1_i32 = arith.constant 1 : i32
    %3 = arith.cmpi eq, %arg1, %c1_i32 : i32
    %c0_i32_1 = arith.constant 0 : i32
    %4 = arith.cmpi eq, %arg2, %c0_i32_1 : i32
    %5 = arith.andi %3, %4 : i1
    %c0 = arith.constant 0 : index
    %c0_2 = arith.constant 0 : index
    %6 = vector.load %arg4[%c0, %c0_2] : memref<8x8xf32, #tpu.memory_space<vmem>>, vector<8x8xf32>
    %c0_3 = arith.constant 0 : index
    %c0_4 = arith.constant 0 : index
    %c0_5 = arith.constant 0 : index
    %7 = vector.load %arg3[%c0_3, %c0_4, %c0_5] : memref<1x8x64xf32, #tpu.memory_space<vmem>>, vector<1x8x64xf32>
    %8 = vector.shape_cast %7 : vector<1x8x64xf32> to vector<8x64xf32>
    %cst = arith.constant dense<0.000000e+00> : vector<8x64xf32>
    %9 = tpu.matmul %6, %8, %cst {dimension_numbers = #tpu.dot_dimension_numbers<[1], [0], [0], [1], [0, 0, 1, 1], [], []>} : vector<8x8xf32>, vector<8x64xf32>, vector<8x64xf32> -> vector<8x64xf32>
    %c0_i32_6 = arith.constant 0 : i32
    %10 = arith.cmpi eq, %arg0, %c0_i32_6 : i32
    %11 = arith.extui %10 : i1 to i32
    %c0_i32_7 = arith.constant 0 : i32
    %12 = arith.cmpi ne, %11, %c0_i32_7 : i32
    scf.if %12 {
      %16 = arith.extui %2 : i1 to i32
      %c0_i32_10 = arith.constant 0 : i32
      %17 = arith.cmpi ne, %16, %c0_i32_10 : i32
      scf.if %17 {
        %cst_22 = arith.constant 0.000000e+00 : f32
        %31 = vector.broadcast %cst_22 : f32 to vector<8x1xf32>
        %c0_23 = arith.constant 0 : index
        %c0_24 = arith.constant 0 : index
        %32 = vector.load %arg8[%c0_23, %c0_24] : memref<8x1xf32, #tpu.memory_space<vmem>>, vector<8x1xf32>
        tpu.vector_store %arg8[%c0_23, %c0_24], %31 {strides = array<i32>} : memref<8x1xf32, #tpu.memory_space<vmem>>, vector<8x1xf32>,
        %cst_25 = arith.constant 0.000000e+00 : f32
        %33 = vector.broadcast %cst_25 : f32 to vector<8x1xf32>
        %c0_26 = arith.constant 0 : index
        %c0_27 = arith.constant 0 : index
        %34 = vector.load %arg9[%c0_26, %c0_27] : memref<8x1xf32, #tpu.memory_space<vmem>>, vector<8x1xf32>
        tpu.vector_store %arg9[%c0_26, %c0_27], %33 {strides = array<i32>} : memref<8x1xf32, #tpu.memory_space<vmem>>, vector<8x1xf32>,
      } else {
      }
      %c0_11 = arith.constant 0 : index
      %c0_12 = arith.constant 0 : index
      %18 = vector.load %arg8[%c0_11, %c0_12] : memref<8x1xf32, #tpu.memory_space<vmem>>, vector<8x1xf32>
      %cst_13 = arith.constant dense<0.000000e+00> : vector<8xf32>
      %19 = vector.multi_reduction <add>, %9, %cst_13 [1] : vector<8x64xf32> to vector<8xf32>
      %20 = vector.shape_cast %19 : vector<8xf32> to vector<8x1xf32>
      %21 = arith.addf %18, %20 : vector<8x1xf32>
      %c0_14 = arith.constant 0 : index
      %c0_15 = arith.constant 0 : index
      %22 = vector.load %arg8[%c0_14, %c0_15] : memref<8x1xf32, #tpu.memory_space<vmem>>, vector<8x1xf32>
      tpu.vector_store %arg8[%c0_14, %c0_15], %21 {strides = array<i32>} : memref<8x1xf32, #tpu.memory_space<vmem>>, vector<8x1xf32>,
      %c0_16 = arith.constant 0 : index
      %c0_17 = arith.constant 0 : index
      %23 = vector.load %arg9[%c0_16, %c0_17] : memref<8x1xf32, #tpu.memory_space<vmem>>, vector<8x1xf32>
      %24 = arith.mulf %9, %9 : vector<8x64xf32>
      %cst_18 = arith.constant dense<0.000000e+00> : vector<8xf32>
      %25 = vector.multi_reduction <add>, %24, %cst_18 [1] : vector<8x64xf32> to vector<8xf32>
      %26 = vector.shape_cast %25 : vector<8xf32> to vector<8x1xf32>
      %27 = arith.addf %23, %26 : vector<8x1xf32>
      %c0_19 = arith.constant 0 : index
      %c0_20 = arith.constant 0 : index
      %28 = vector.load %arg9[%c0_19, %c0_20] : memref<8x1xf32, #tpu.memory_space<vmem>>, vector<8x1xf32>
      tpu.vector_store %arg9[%c0_19, %c0_20], %27 {strides = array<i32>} : memref<8x1xf32, #tpu.memory_space<vmem>>, vector<8x1xf32>,
      %29 = arith.extui %5 : i1 to i32
      %c0_i32_21 = arith.constant 0 : i32
      %30 = arith.cmpi ne, %29, %c0_i32_21 : i32
      scf.if %30 {
        %c0_22 = arith.constant 0 : index
        %c0_23 = arith.constant 0 : index
        %31 = vector.load %arg8[%c0_22, %c0_23] : memref<8x1xf32, #tpu.memory_space<vmem>>, vector<8x1xf32>
        %cst_24 = arith.constant 7.812500e-03 : f32
        %32 = vector.broadcast %cst_24 : f32 to vector<8x1xf32>
        %33 = arith.mulf %31, %32 : vector<8x1xf32>
        %c0_25 = arith.constant 0 : index
        %c0_26 = arith.constant 0 : index
        %34 = vector.load %arg9[%c0_25, %c0_26] : memref<8x1xf32, #tpu.memory_space<vmem>>, vector<8x1xf32>
        %cst_27 = arith.constant 7.812500e-03 : f32
        %35 = vector.broadcast %cst_27 : f32 to vector<8x1xf32>
        %36 = arith.mulf %34, %35 : vector<8x1xf32>
        %37 = arith.mulf %33, %33 : vector<8x1xf32>
        %38 = arith.subf %36, %37 : vector<8x1xf32>
        %cst_28 = arith.constant 9.99999974E-6 : f32
        %39 = vector.broadcast %cst_28 : f32 to vector<8x1xf32>
        %40 = arith.addf %38, %39 : vector<8x1xf32>
        %41 = math.rsqrt %40 : vector<8x1xf32>
        %c0_29 = arith.constant 0 : index
        %c0_30 = arith.constant 0 : index
        %42 = vector.load %arg5[%c0_29, %c0_30] : memref<8x1xf32, #tpu.memory_space<vmem>>, vector<8x1xf32>
        %43 = arith.mulf %41, %42 : vector<8x1xf32>
        %c0_31 = arith.constant 0 : index
        %c0_32 = arith.constant 0 : index
        %44 = vector.load %arg8[%c0_31, %c0_32] : memref<8x1xf32, #tpu.memory_space<vmem>>, vector<8x1xf32>
        tpu.vector_store %arg8[%c0_31, %c0_32], %43 {strides = array<i32>} : memref<8x1xf32, #tpu.memory_space<vmem>>, vector<8x1xf32>,
        %c0_33 = arith.constant 0 : index
        %c0_34 = arith.constant 0 : index
        %45 = vector.load %arg6[%c0_33, %c0_34] : memref<8x1xf32, #tpu.memory_space<vmem>>, vector<8x1xf32>
        %46 = arith.mulf %33, %43 : vector<8x1xf32>
        %47 = arith.subf %45, %46 : vector<8x1xf32>
        %c0_35 = arith.constant 0 : index
        %c0_36 = arith.constant 0 : index
        %48 = vector.load %arg9[%c0_35, %c0_36] : memref<8x1xf32, #tpu.memory_space<vmem>>, vector<8x1xf32>
        tpu.vector_store %arg9[%c0_35, %c0_36], %47 {strides = array<i32>} : memref<8x1xf32, #tpu.memory_space<vmem>>, vector<8x1xf32>,
      } else {
      }
    } else {
    }
    %c1_i32_8 = arith.constant 1 : i32
    %13 = arith.cmpi eq, %arg0, %c1_i32_8 : i32
    %14 = arith.extui %13 : i1 to i32
    %c0_i32_9 = arith.constant 0 : i32
    %15 = arith.cmpi ne, %14, %c0_i32_9 : i32
    scf.if %15 {
      %c0_10 = arith.constant 0 : index
      %c0_11 = arith.constant 0 : index
      %16 = vector.load %arg8[%c0_10, %c0_11] : memref<8x1xf32, #tpu.memory_space<vmem>>, vector<8x1xf32>
      %17 = vector.broadcast %16 : vector<8x1xf32> to vector<8x64xf32>
      %18 = arith.mulf %9, %17 : vector<8x64xf32>
      %c0_12 = arith.constant 0 : index
      %c0_13 = arith.constant 0 : index
      %19 = vector.load %arg9[%c0_12, %c0_13] : memref<8x1xf32, #tpu.memory_space<vmem>>, vector<8x1xf32>
      %20 = vector.broadcast %19 : vector<8x1xf32> to vector<8x64xf32>
      %21 = arith.addf %18, %20 : vector<8x64xf32>
      %c0_14 = arith.constant 0 : index
      %c0_15 = arith.constant 0 : index
      %c0_16 = arith.constant 0 : index
      %22 = vector.load %arg7[%c0_14, %c0_15, %c0_16] : memref<1x8x64xf32, #tpu.memory_space<vmem>>, vector<1x8x64xf32>
      %23 = vector.shape_cast %22 : vector<1x8x64xf32> to vector<8x64xf32>
      %24 = vector.shape_cast %21 : vector<8x64xf32> to vector<1x8x64xf32>
      tpu.vector_store %arg7[%c0_14, %c0_15, %c0_16], %24 {strides = array<i32>} : memref<1x8x64xf32, #tpu.memory_space<vmem>>, vector<1x8x64xf32>,
    } else {
    }
    return
  }
  func.func @transform_0(%arg0: i32, %arg1: i32, %arg2: i32) -> (i32, i32, i32) {
    %c0_i32 = arith.constant 0 : i32
    %c0_i32_0 = arith.constant 0 : i32
    return %arg1, %c0_i32, %arg2 : i32, i32, i32
  }
  func.func @transform_1(%arg0: i32, %arg1: i32, %arg2: i32) -> (i32, i32) {
    %c0_i32 = arith.constant 0 : i32
    %c0_i32_0 = arith.constant 0 : i32
    %c0_i32_1 = arith.constant 0 : i32
    return %c0_i32, %c0_i32_0 : i32, i32
  }
  func.func @transform_2(%arg0: i32, %arg1: i32, %arg2: i32) -> (i32, i32) {
    %c0_i32 = arith.constant 0 : i32
    %c0_i32_0 = arith.constant 0 : i32
    %c0_i32_1 = arith.constant 0 : i32
    return %c0_i32, %c0_i32_0 : i32, i32
  }
  func.func @transform_3(%arg0: i32, %arg1: i32, %arg2: i32) -> (i32, i32) {
    %c0_i32 = arith.constant 0 : i32
    %c0_i32_0 = arith.constant 0 : i32
    %c0_i32_1 = arith.constant 0 : i32
    return %c0_i32, %c0_i32_0 : i32, i32
  }
  func.func @transform_4(%arg0: i32, %arg1: i32, %arg2: i32) -> (i32, i32, i32) {
    %0 = arith.muli %arg1, %arg0 : i32
    %1 = arith.muli %arg2, %arg0 : i32
    %c0_i32 = arith.constant 0 : i32
    %c0_i32_0 = arith.constant 0 : i32
    return %0, %c0_i32, %1 : i32, i32, i32
  }
}

</mosaic_0001>

<llo_original>
// kernel: tpu_custom_call.1
$region0: #{tpu_custom_call.1}
  #allocation0 [shape = 'u32[]', space=smem, size = 0x4, offset = 0x4, fixed_abs, tag = 'smem constant byte address 0x4 - core index']
  #allocation1 [shape = 'u32[144,128]{1,0:T(1,128)}', space=vmem, size = 0x12000, scoped, tag = 'internal scratch']
  #allocation2 [shape = 'f32[8,1]{1,0:T(8,128)}', space=vmem, size = 0x1000, scoped, tag = 'scratch operand']
  #allocation3 [shape = 'f32[8,1]{1,0:T(8,128)}', space=vmem, size = 0x1000, scoped, tag = 'scratch operand']
  %s0 = inlined_call_operand.vmem [shape: f32[2,8,64], index: 0, kind: input, shape index: {}]
  %s1 = inlined_call_operand.hbm [shape: f32[8,8], index: 1, kind: input, shape index: {}]
  %s2 = inlined_call_operand.vmem [shape: f32[8,1], index: 2, kind: input, shape index: {}]
  %s3 = inlined_call_operand.vmem [shape: f32[8,1], index: 3, kind: input, shape index: {}]
  %s4 = inlined_call_operand.hbm [shape: f32[2,8,64], index: 4, kind: output, shape index: {}]
  %s5 = sld [smem:[#allocation0]]
  $region69: #{tpu_custom_call.1} parent=0
    _
  %s7 = ssub.s32 1, %s5
  %s8 = scalar_select 0, %s7, %s5
  $region1: #{tpu_custom_call.1} parent=0
    #allocation4 [shape = 'u8[4096]{0}', space=vmem, size = 0x1000, scoped, tag = 'input window, operand 1, single buffered']
    #allocation5 [shape = 's32[2]{0}', space=sflag, size = 0x8, scoped, tag = 'scoped memory for tpu_custom_call.1']
    #allocation6 [shape = 's32[2]{0}', space=sflag, size = 0x8, scoped, tag = 'scoped memory for tpu_custom_call.1']
    #allocation7 [shape = 'u8[8192]{0}', space=vmem, size = 0x2000, scoped, tag = 'output window, operand 0']
    %9 = vsyncpa [#allocation5], 0
    %10 = vsyncpa [#allocation6], 0
    %s11 = scalar_lea.sflag [#allocation6], 1
    %12 = vsyncpa %s11, 0
    loop: start=0, step=1, limit=6
    $region2: #{tpu_custom_call.1} parent=1 // loop_pre_header
      _
    $region3: #{tpu_custom_call.1} parent=1 // loop_header
      %s14 = sphi 0, %s18
      %p15 = scmp.ge.s32.totalorder %s14, 6
      %s21 = sphi 0, %s40
      %s22 = sphi 0, %s36
      %s23 = sphi 0, %s32
      %s24 = sphi 0, %s21
      %s25 = sphi 0, %s22
      %s26 = sphi 0, %s23
      %s27 = sphi 0, %s24
      %s28 = sphi 0, %s25
      %s29 = sphi 0, %s26
      %s45 = sphi 0, %s47
      %s48 = sphi 0, %s45
      %s49 = sphi 0, %s48
      %s65 = sphi 0, %s49
      %s69 = sphi 0, %s69
      %s71 = sphi 0, %s69
      %s72 = sphi 0, %s71
      %s86 = sphi 0, %s72
      %s90 = sphi 0, %s90
      %s92 = sphi 0, %s90
      %s93 = sphi 0, %s92
      %s107 = sphi 0, %s93
      %s111 = sphi 0, %s111
      %s113 = sphi 0, %s111
      %s114 = sphi 0, %s113
      %s128 = sphi 0, %s114
      %s140 = sphi 0, %s142
      %s143 = sphi 0, %s140
      %s144 = sphi 0, %s143
      %s160 = sphi 0, %s144
    $region4: #{tpu_custom_call.1} parent=1 // loop_header_branch
      %17 = sbr.rel (%p15) target = $region8
    $region5: #{tpu_custom_call.1} parent=1 // loop_body
      %s19 = ssub.s32 %s14, 1
      %s20 = ssub.s32 %s14, 2
      %s30 = sadd.s32 1, %s23
      %p31 = scmp.ge.s32.totalorder %s30, 1
      %s32 = scalar_select %p31, 0, %s30
      %s33 = sadd.s32 1, %s22
      %s34 = scalar_select %p31, %s33, %s22
      %p35 = scmp.ge.s32.totalorder %s34, 2
      %s36 = scalar_select %p35, 0, %s34
      %s37 = sadd.s32 1, %s21
      %s38 = scalar_select %p35, %s37, %s21
      %p39 = scmp.ge.s32.totalorder %s38, 2
      %s40 = scalar_select %p39, 0, %s38
      %s41 = ssub.s32 %s22, %s36
      %s42 = ssub.s32 %s23, %s32
      %s43 = sor.u32 %s41, %s42
      %p44 = scmp.eq.s32.totalorder %s43, 0
      %s46 = sadd.s32 %s45, 1
      %s47 = scalar_select %p44, %s45, %s46
      %p50 = pneg %p44
      %p51 = scmp.eq.s32.totalorder %s14, 3
      %p52 = por %p50, %p51
      %p53 = scmp.ne.s32.totalorder %s45, %s48
      %p54 = scmp.eq.s32.totalorder %s14, 0
      %p55 = por %p53, %p54
      %p56 = scmp.ne.s32.totalorder %s45, %s48
      %p57 = scmp.eq.s32.totalorder %s19, 3
      %p58 = por %p56, %p57
      %p59 = scmp.ne.s32.totalorder %s48, %s49
      %p60 = scmp.eq.s32.totalorder %s19, 0
      %p61 = por %p59, %p60
      %p62 = scmp.ne.s32.totalorder %s48, %s49
      %p63 = scmp.eq.s32.totalorder %s20, 3
      %p64 = por %p62, %p63
      %p66 = scmp.ne.s32.totalorder %s49, %s65
      %p67 = scmp.eq.s32.totalorder %s20, 0
      %p68 = por %p66, %p67
      %s70 = sadd.s32 %s69, 1
      %p73 = scmp.eq.s32.totalorder %s14, 3
      %p74 = scmp.ne.s32.totalorder %s69, %s71
      %p75 = scmp.eq.s32.totalorder %s14, 0
      %p76 = por %p74, %p75
      %p77 = scmp.ne.s32.totalorder %s69, %s71
      %p78 = scmp.eq.s32.totalorder %s19, 3
      %p79 = por %p77, %p78
      %p80 = scmp.ne.s32.totalorder %s71, %s72
      %p81 = scmp.eq.s32.totalorder %s19, 0
      %p82 = por %p80, %p81
      %p83 = scmp.ne.s32.totalorder %s71, %s72
      %p84 = scmp.eq.s32.totalorder %s20, 3
      %p85 = por %p83, %p84
      %p87 = scmp.ne.s32.totalorder %s72, %s86
      %p88 = scmp.eq.s32.totalorder %s20, 0
      %p89 = por %p87, %p88
      %s91 = sadd.s32 %s90, 1
      %p94 = scmp.eq.s32.totalorder %s14, 3
      %p95 = scmp.ne.s32.totalorder %s90, %s92
      %p96 = scmp.eq.s32.totalorder %s14, 0
      %p97 = por %p95, %p96
      %p98 = scmp.ne.s32.totalorder %s90, %s92
      %p99 = scmp.eq.s32.totalorder %s19, 3
      %p100 = por %p98, %p99
      %p101 = scmp.ne.s32.totalorder %s92, %s93
      %p102 = scmp.eq.s32.totalorder %s19, 0
      %p103 = por %p101, %p102
      %p104 = scmp.ne.s32.totalorder %s92, %s93
      %p105 = scmp.eq.s32.totalorder %s20, 3
      %p106 = por %p104, %p105
      %p108 = scmp.ne.s32.totalorder %s93, %s107
      %p109 = scmp.eq.s32.totalorder %s20, 0
      %p110 = por %p108, %p109
      %s112 = sadd.s32 %s111, 1
      %p115 = scmp.eq.s32.totalorder %s14, 3
      %p116 = scmp.ne.s32.totalorder %s111, %s113
      %p117 = scmp.eq.s32.totalorder %s14, 0
      %p118 = por %p116, %p117
      %p119 = scmp.ne.s32.totalorder %s111, %s113
      %p120 = scmp.eq.s32.totalorder %s19, 3
      %p121 = por %p119, %p120
      %p122 = scmp.ne.s32.totalorder %s113, %s114
      %p123 = scmp.eq.s32.totalorder %s19, 0
      %p124 = por %p122, %p123
      %p125 = scmp.ne.s32.totalorder %s113, %s114
      %p126 = scmp.eq.s32.totalorder %s20, 3
      %p127 = por %p125, %p126
      %p129 = scmp.ne.s32.totalorder %s114, %s128
      %p130 = scmp.eq.s32.totalorder %s20, 0
      %p131 = por %p129, %p130
      %s132 = smul.u32 %s22, %s21
      %s133 = smul.u32 %s23, %s21
      %s134 = smul.u32 %s36, %s40
      %s135 = smul.u32 %s32, %s40
      %s136 = ssub.s32 %s132, %s134
      %s137 = ssub.s32 %s133, %s135
      %s138 = sor.u32 %s136, %s137
      %p139 = scmp.eq.s32.totalorder %s138, 0
      %s141 = sadd.s32 %s140, 1
      %s142 = scalar_select %p139, %s140, %s141
      %p145 = pneg %p139
      %p146 = scmp.eq.s32.totalorder %s14, 3
      %p147 = por %p145, %p146
      %p148 = scmp.ne.s32.totalorder %s140, %s143
      %p149 = scmp.eq.s32.totalorder %s14, 0
      %p150 = por %p148, %p149
      %p151 = scmp.ne.s32.totalorder %s140, %s143
      %p152 = scmp.eq.s32.totalorder %s19, 3
      %p153 = por %p151, %p152
      %p154 = scmp.ne.s32.totalorder %s143, %s144
      %p155 = scmp.eq.s32.totalorder %s19, 0
      %p156 = por %p154, %p155
      %p157 = scmp.ne.s32.totalorder %s143, %s144
      %p158 = scmp.eq.s32.totalorder %s20, 3
      %p159 = por %p157, %p158
      %p161 = scmp.ne.s32.totalorder %s144, %s160
      %p162 = scmp.eq.s32.totalorder %s20, 0
      %p163 = por %p161, %p162
      %p164 = scmp.le.s32.totalorder 1, %s14
      %p165 = scmp.lt.s32.totalorder %s14, 5
      %p166 = pnand %p164, %p165
      %p167 = pneg %p166
      // Predicated region
      $region9: #{tpu_custom_call.1} parent=5 // pred_check
        _
      $region10: #{tpu_custom_call.1} parent=5 // pred_check_branch
        %169 = sbr.rel (%p166) target = $region12
      $region11: #{tpu_custom_call.1} parent=5 // pred_region
        %s170 = ssub.s32 %s14, 1
        // Predicated region
        $region13: #{tpu_custom_call.1} parent=11 // pred_check
          %p171 = pneg %p82
        $region14: #{tpu_custom_call.1} parent=11 // pred_check_branch
          %173 = sbr.rel (%p171) target = $region16
        $region15: #{tpu_custom_call.1} parent=11 // pred_region
          %s175 = ssub.s32 128, 128
          %176 = vsyncadd [#allocation5], %s175
          %s178 = sshll.u32 [#allocation4], 4
          %s179 = int_to_ptr.vmem [resolvable:$true] %s178
          %181 = dma.hbm_to_vmem [thread:$0]  %s1, 128, %s179, [#allocation5]
        $region16: #{tpu_custom_call.1} parent=11 // pred_fallthru
          _
        // Predicated region
        $region17: #{tpu_custom_call.1} parent=11 // pred_check
          %p182 = pneg %p103
        $region18: #{tpu_custom_call.1} parent=11 // pred_check_branch
          %184 = sbr.rel (%p182) target = $region20
        $region19: #{tpu_custom_call.1} parent=11 // pred_region
          _
        $region20: #{tpu_custom_call.1} parent=11 // pred_fallthru
          _
        // Predicated region
        $region21: #{tpu_custom_call.1} parent=11 // pred_check
          %p185 = pneg %p124
        $region22: #{tpu_custom_call.1} parent=11 // pred_check_branch
          %187 = sbr.rel (%p185) target = $region24
        $region23: #{tpu_custom_call.1} parent=11 // pred_region
          _
        $region24: #{tpu_custom_call.1} parent=11 // pred_fallthru
          _
      $region12: #{tpu_custom_call.1} parent=5 // pred_fallthru
        _
      %p188 = scmp.lt.s32.totalorder %s14, 4
      // Predicated region
      $region25: #{tpu_custom_call.1} parent=5 // pred_check
        %p189 = pneg %p188
      $region26: #{tpu_custom_call.1} parent=5 // pred_check_branch
        %191 = sbr.rel (%p189) target = $region28
      $region27: #{tpu_custom_call.1} parent=5 // pred_region
        // Predicated region
        $region29: #{tpu_custom_call.1} parent=27 // pred_check
          %p192 = pneg %p55
        $region30: #{tpu_custom_call.1} parent=27 // pred_check_branch
          %194 = sbr.rel (%p192) target = $region32
        $region31: #{tpu_custom_call.1} parent=27 // pred_region
          %p195 = scmp.lt.s32.totalorder %s22, 1
          %s196 = scalar_select %p195, %s22, 1
          %p197 = scmp.lt.s32.totalorder %s23, 0
          %s198 = scalar_select %p197, %s23, 0
          %s199 = sadd.s32 %s198, %s196
          %s200 = smul.addr %s199, 8
          %s201 = scalar_lea.vmem %s0, %s200
        $region32: #{tpu_custom_call.1} parent=27 // pred_fallthru
          _
      $region28: #{tpu_custom_call.1} parent=5 // pred_fallthru
        _
      %p202 = scmp.le.s32.totalorder 1, %s14
      %p203 = scmp.lt.s32.totalorder %s14, 5
      %p204 = pnand %p202, %p203
      %p205 = pneg %p204
      // Predicated region
      $region33: #{tpu_custom_call.1} parent=5 // pred_check
        _
      $region34: #{tpu_custom_call.1} parent=5 // pred_check_branch
        %207 = sbr.rel (%p204) target = $region36
      $region35: #{tpu_custom_call.1} parent=5 // pred_region
        %s208 = ssub.s32 %s14, 1
        // Predicated region
        $region37: #{tpu_custom_call.1} parent=35 // pred_check
          %p209 = pneg %p82
        $region38: #{tpu_custom_call.1} parent=35 // pred_check_branch
          %211 = sbr.rel (%p209) target = $region40
        $region39: #{tpu_custom_call.1} parent=35 // pred_region
          %212 = dma.done [#allocation5], 128
        $region40: #{tpu_custom_call.1} parent=35 // pred_fallthru
          _
        %p213 = scmp.lt.s32.totalorder %s25, 1
        %s214 = scalar_select %p213, %s25, 1
        %p215 = scmp.lt.s32.totalorder %s26, 0
        %s216 = scalar_select %p215, %s26, 0
        %s217 = sadd.s32 %s216, %s214
        %s218 = smul.addr %s217, 8
        %s219 = scalar_lea.vmem %s0, %s218
        %p220 = pneg %p61
        %p221 = pneg %p58
        %p222 = pneg %p82
        %p223 = pneg %p79
        %p224 = pneg %p103
        %p225 = pneg %p100
        %p226 = pneg %p124
        %p227 = pneg %p121
        %p228 = pneg %p156
        %p229 = pneg %p153
        %s230 = sand.u32 %s143, 1
        %s231 = scalar_lea.sflag [#allocation6], %s230
        %s232 = sand.u32 %s143, 1
        %s233 = smul.addr %s232, 8
        %s234 = scalar_lea.vmem [#allocation7], %s233
        %p235 = scmp.lt.s32.totalorder %s25, 1
        %s236 = scalar_select %p235, %s25, 1
        %p237 = scmp.lt.s32.totalorder %s26, 0
        %s238 = scalar_select %p237, %s26, 0
        %s239 = sadd.s32 %s238, %s236
        %s240 = smul.addr %s239, 8
        %s241 = scalar_lea.vmem %s0, %s240
        %s242 = smul.u32 %s25, %s24
        %s243 = smul.u32 %s26, %s24
        %p244 = scmp.eq.s32.totalorder %s25, 0
        %p245 = scmp.eq.s32.totalorder %s26, 0
        %p246 = pnand %p244, %p245
        %p247 = pneg %p246
        %p248 = scmp.eq.s32.totalorder %s25, 1
        %p249 = pnand %p248, %p245
        %p250 = pneg %p249
        %v251 = vld [vmem:[#allocation4] sm:$0xff]
        %v252 = vld [vmem:[%s241] sm:$0xff]
        %vm253 = vcmask 64512
        %v255 = vsel %vm253, %v251, 0
        %257 = vmatprep.subr.mxu0 0.0
        %258 = vmatpush1.msra.mxu0 0.0
        %259 = vmatprep.subr.mxu0 0.0
        %260 = vmatpush1.msra.mxu0 0.0
        %261 = vmatprep.subr.mxu0 0.0
        %262 = vmatpush1.msra.mxu0 0.0
        %263 = vmatprep.subr.mxu0 0.0
        %264 = vmatpush1.msra.mxu0 0.0
        %265 = vmatprep.subr.mxu0 0.0
        %266 = vmatpush1.msra.mxu0 0.0
        %267 = vmatprep.subr.mxu0 0.0
        %268 = vmatpush1.msra.mxu0 0.0
        %269 = vmatprep.subr.mxu0 0.0
        %270 = vmatpush1.msra.mxu0 0.0
        %271 = vmatprep.subr.mxu0 0.0
        %272 = vmatpush1.msra.mxu0 0.0
        %273 = vmatprep.subr.mxu0 0.0
        %274 = vmatpush1.msra.mxu0 0.0
        %275 = vmatprep.subr.mxu0 0.0
        %276 = vmatpush1.msra.mxu0 0.0
        %277 = vmatprep.subr.mxu0 0.0
        %278 = vmatpush1.msra.mxu0 0.0
        %279 = vmatprep.subr.mxu0 0.0
        %280 = vmatpush1.msra.mxu0 0.0
        %281 = vmatprep.subr.mxu0 0.0
        %282 = vmatpush1.msra.mxu0 0.0
        %283 = vmatprep.subr.mxu0 0.0
        %284 = vmatpush1.msra.mxu0 0.0
        %285 = vmatprep.subr.mxu0 0.0
        %286 = vmatpush1.msra.mxu0 0.0
        %287 = vmatprep.subr.mxu0 0.0
        %288 = vmatpush1.msra.mxu0 %v252
        %289 = vmatprep.subr.mxu0 0.0
        %290 = vmatpush2.msra.mxu0 0.0
        %291 = vmatprep.subr.mxu0 0.0
        %292 = vmatpush2.msra.mxu0 0.0
        %293 = vmatprep.subr.mxu0 0.0
        %294 = vmatpush2.msra.mxu0 0.0
        %295 = vmatprep.subr.mxu0 0.0
        %296 = vmatpush2.msra.mxu0 0.0
        %297 = vmatprep.subr.mxu0 0.0
        %298 = vmatpush2.msra.mxu0 0.0
        %299 = vmatprep.subr.mxu0 0.0
        %300 = vmatpush2.msra.mxu0 0.0
        %301 = vmatprep.subr.mxu0 0.0
        %302 = vmatpush2.msra.mxu0 0.0
        %303 = vmatprep.subr.mxu0 0.0
        %304 = vmatpush2.msra.mxu0 0.0
        %305 = vmatprep.subr.mxu0 0.0
        %306 = vmatpush2.msra.mxu0 0.0
        %307 = vmatprep.subr.mxu0 0.0
        %308 = vmatpush2.msra.mxu0 0.0
        %309 = vmatprep.subr.mxu0 0.0
        %310 = vmatpush2.msra.mxu0 0.0
        %311 = vmatprep.subr.mxu0 0.0
        %312 = vmatpush2.msra.mxu0 0.0
        %313 = vmatprep.subr.mxu0 0.0
        %314 = vmatpush2.msra.mxu0 0.0
        %315 = vmatprep.subr.mxu0 0.0
        %316 = vmatpush2.msra.mxu0 0.0
        %317 = vmatprep.subr.mxu0 0.0
        %318 = vmatpush2.msra.mxu0 0.0
        %319 = vmatprep.subr.mxu0 0.0
        %320 = vmatpush2.msra.mxu0 0.0
        %321 = vmatprep.mubr.f32.mxu0 0.0
        %322 = vmatmul.mubr.f32.gmra.mxu0 %v255
        %v323 = vpop.f32.mrf.mxu0
        %v324 = vadd.f32 0.0, %v323
        %v325 = vpop.f32.mrf.mxu0
        %326 = vdwg.mxu0
        %p327 = scmp.eq.s32.totalorder %s24, 0
        // Predicated region
        $region41: #{tpu_custom_call.1} parent=35 // pred_check
          %p328 = pneg %p327
        $region42: #{tpu_custom_call.1} parent=35 // pred_check_branch
          %330 = sbr.rel (%p328) target = $region44
        $region43: #{tpu_custom_call.1} parent=35 // pred_region
          // Predicated region
          $region45: #{tpu_custom_call.1} parent=43 // pred_check
            _
          $region46: #{tpu_custom_call.1} parent=43 // pred_check_branch
            %332 = sbr.rel (%p246) target = $region48
          $region47: #{tpu_custom_call.1} parent=43 // pred_region
            %vm333 = vcmask 7168
            %334 = vst.msk [vmem:[#allocation2] sm:$0xff] %vm333, 0.0
            %335 = vst.msk [vmem:[#allocation3] sm:$0xff] %vm333, 0.0
          $region48: #{tpu_custom_call.1} parent=43 // pred_fallthru
            _
          %v336 = vld [vmem:[#allocation2] sm:$0xff]
          %vm337 = vcmask 523264
          %v338 = vsel %vm337, %v324, 0.0
          %339 = vadd.xlane.f32.xlu0 %v338
          %v340 = vpop.xlane.xlu0 %339
          %v341 = vadd.f32 %v336, %v340
          %vm342 = vcmask 7168
          %343 = vst.msk [vmem:[#allocation2] sm:$0xff] %vm342, %v341
          %v344 = vld [vmem:[#allocation3] sm:$0xff]
          %v345 = vmul.f32 %v324, %v324
          %v346 = vsel %vm337, %v345, 0.0
          %347 = vadd.xlane.f32.xlu0 %v346
          %v348 = vpop.xlane.xlu0 %347
          %v349 = vadd.f32 %v344, %v348
          %350 = vst.msk [vmem:[#allocation3] sm:$0xff] %vm342, %v349
          // Predicated region
          $region49: #{tpu_custom_call.1} parent=43 // pred_check
            _
          $region50: #{tpu_custom_call.1} parent=43 // pred_check_branch
            %352 = sbr.rel (%p249) target = $region52
          $region51: #{tpu_custom_call.1} parent=43 // pred_region
            %v353 = vld [vmem:[#allocation2] sm:$0xff]
            %v354 = vmul.f32 %v353, 0.0078125
            %v355 = vld [vmem:[#allocation3] sm:$0xff]
            %v356 = vmul.f32 %v355, 0.0078125
            %v357 = vmul.f32 %v354, %v354
            %v358 = vsub.f32 %v356, %v357
            %v359 = vadd.f32 %v358, 1e-05
            %v360 = vrsqrt.pop %v359
            %v361 = vld [vmem:[%s2] sm:$0xff]
            %v362 = vmul.f32 %v360, %v361
            %363 = vst.msk [vmem:[#allocation2] sm:$0xff] %vm342, %v362
            %v364 = vld [vmem:[%s3] sm:$0xff]
            %v365 = vmul.f32 %v354, %v362
            %v366 = vsub.f32 %v364, %v365
            %367 = vst.msk [vmem:[#allocation3] sm:$0xff] %vm342, %v366
          $region52: #{tpu_custom_call.1} parent=43 // pred_fallthru
            _
        $region44: #{tpu_custom_call.1} parent=35 // pred_fallthru
          _
        %p368 = scmp.eq.s32.totalorder %s24, 1
        // Predicated region
        $region53: #{tpu_custom_call.1} parent=35 // pred_check
          %p369 = pneg %p368
        $region54: #{tpu_custom_call.1} parent=35 // pred_check_branch
          %371 = sbr.rel (%p369) target = $region56
        $region55: #{tpu_custom_call.1} parent=35 // pred_region
          %v372 = vld [vmem:[#allocation2] sm:$0xff]
          %374 = vset.pattern.permute.xlu0 0
          %375 = vperm.xlu0 %374, %v372
          %v376 = vpop.permute.xlu0 %375
          %v378 = vmul.f32 %v324, %v376
          %v379 = vld [vmem:[#allocation3] sm:$0xff]
          %381 = vset.pattern.permute.xlu0 0
          %382 = vperm.xlu0 %381, %v379
          %v383 = vpop.permute.xlu0 %382
          %v385 = vadd.f32 %v378, %v383
          %vm386 = vcmask 523264
          %387 = vst.msk [vmem:[%s234] sm:$0xff] %vm386, %v385
        $region56: #{tpu_custom_call.1} parent=35 // pred_fallthru
          _
        %s388 = sand.u32 %s143, 1
        %s389 = scalar_lea.sflag [#allocation6], %s388
        %s390 = sand.u32 %s143, 1
        %s391 = smul.addr %s390, 8
        %s392 = scalar_lea.vmem [#allocation7], %s391
        // Predicated region
        $region57: #{tpu_custom_call.1} parent=35 // pred_check
          %p393 = pneg %p153
        $region58: #{tpu_custom_call.1} parent=35 // pred_check_branch
          %395 = sbr.rel (%p393) target = $region60
        $region59: #{tpu_custom_call.1} parent=35 // pred_region
          %s396 = smul.u32 %s25, %s24
          %s397 = smul.u32 %s26, %s24
          %s399 = ssub.s32 128, 128
          %400 = vsyncadd %s389, %s399
          %s401 = sadd.s32 %s397, %s396
          %s402 = smul.addr %s401, 128
          %s403 = scalar_lea.hbm %s4, %s402
          %s405 = sshll.u32 %s392, 4
          %s406 = int_to_ptr.vmem [resolvable:$true] %s405
          %408 = dma.vmem_to_hbm [thread:$0]  %s406, 128, %s403, %s389
        $region60: #{tpu_custom_call.1} parent=35 // pred_fallthru
          _
      $region36: #{tpu_custom_call.1} parent=5 // pred_fallthru
        _
      %p409 = scmp.le.s32.totalorder 2, %s14
      // Predicated region
      $region61: #{tpu_custom_call.1} parent=5 // pred_check
        %p410 = pneg %p409
      $region62: #{tpu_custom_call.1} parent=5 // pred_check_branch
        %412 = sbr.rel (%p410) target = $region64
      $region63: #{tpu_custom_call.1} parent=5 // pred_region
        %s413 = ssub.s32 %s14, 2
        // Predicated region
        $region65: #{tpu_custom_call.1} parent=63 // pred_check
          %p414 = pneg %p159
        $region66: #{tpu_custom_call.1} parent=63 // pred_check_branch
          %416 = sbr.rel (%p414) target = $region68
        $region67: #{tpu_custom_call.1} parent=63 // pred_region
          %s417 = sand.u32 %s144, 1
          %s418 = scalar_lea.sflag [#allocation6], %s417
          %s419 = sand.u32 %s144, 1
          %s420 = smul.addr %s419, 8
          %s421 = scalar_lea.vmem [#allocation7], %s420
          %422 = dma.done %s418, 128
        $region68: #{tpu_custom_call.1} parent=63 // pred_fallthru
          _
      $region64: #{tpu_custom_call.1} parent=5 // pred_fallthru
        _
    $region6: #{tpu_custom_call.1} parent=1 // loop_footer
      %s18 = sadd.s32 1, %s14
    $region7: #{tpu_custom_call.1} parent=1 // loop_footer_branch
      %13 = sbr.rel target = $region3
    $region8: #{tpu_custom_call.1} parent=1 // loop_exit
      _
    %423 = vsyncpa [#allocation5], 1
    %s424 = scalar_lea.sflag [#allocation5], 1
    %425 = vsyncpa %s424, 1
    %426 = vsyncpa [#allocation6], 1
    %s427 = scalar_lea.sflag [#allocation6], 1
    %428 = vsyncpa %s427, 1

</llo_original>
